<compile_context>
chip_gen: v7x
topology: tpu7x:2x2x1
jax: 0.10.0
libtpu: 0.0.40
codegen_flags: <defaults>
</compile_context>

<pallas_src>
import functools

import jax
import jax.numpy as jnp
from jax import lax
from jax.experimental import pallas as pl
from jax.experimental.pallas import tpu as pltpu

BN_EPS = 1e-5


def inr_block_kernel(mbw_ref,        # SMEM (1,) f32    : main_branch_weight
                     x_hbm,          # ANY  (B, K)      : full input, raw HBM ref
                     w_ref,          # VMEM (K, tn)     : weight tile (caller dtype)
                     gamma_ref,      # VMEM (1, tn) f32 : BN scale
                     beta_ref,       # VMEM (1, tn) f32 : BN shift
                     o_ref,          # VMEM (B, tn)     : output tile
                     *scratch,
                     tile_n, cast_x):
    if cast_x:
        x_f32, x_mm, copy_sem = scratch      # f32 copy (residual) + matmul-dtype copy
    else:
        x_f32, copy_sem = scratch
        x_mm = x_f32

    j = pl.program_id(0)

    # One-time work: pull x into VMEM (single-buffered) and cast once for the MXU.
    @pl.when(j == 0)
    def _():
        cp = pltpu.make_async_copy(x_hbm, x_f32, copy_sem.at[0])
        cp.start()
        cp.wait()
        if cast_x:
            x_mm[...] = x_f32[...].astype(x_mm.dtype)

    # Linear (bias intentionally omitted: cancels under train-mode BN).
    y = jnp.dot(x_mm[...], w_ref[...], preferred_element_type=jnp.float32)

    # BatchNorm1d training-mode stats (each grid step sees the whole batch, so the
    # per-feature statistics are exact).  One pass: sum and sum-of-squares.
    inv_b = jnp.float32(1.0 / y.shape[0])
    s1 = jnp.sum(y, axis=0, keepdims=True)
    s2 = jnp.sum(y * y, axis=0, keepdims=True)
    mean = s1 * inv_b
    var = jnp.maximum(s2 * inv_b - mean * mean, 0.0)   # clamp guards cancellation

    # Fold gamma into the rsqrt scale and the mean into the shift:
    #   z = scale * y + (beta - scale * mean); rsqrt goes to the EUP slot.
    scale = gamma_ref[...] * lax.rsqrt(var + BN_EPS)   # (1, tile_n)
    shift = beta_ref[...] - scale * mean               # (1, tile_n)
    z = jnp.maximum(scale * y + shift, 0.0)            # ReLU

    # Residual tile sliced from the resident f32 x scratch (x read from HBM once).
    if tile_n == x_f32.shape[1]:
        x_res = x_f32[...]
    else:
        start = pl.multiple_of(j * tile_n, 128)        # lane-aligned slice
        x_res = x_f32[:, pl.ds(start, tile_n)]

    # Residual add in f32; cast only at the final store.
    o_ref[...] = (x_res + mbw_ref[0] * z).astype(o_ref.dtype)


def inr_generator_block(x, w, gamma, beta, main_branch_weight,
                        *, tile_n=None, out_dtype=None):
    """x: (B, F) f32; w: (F, F) stored (in, out) in the dtype the caller holds
    (pass a cached bf16 copy for reused weights; f32 streams directly); gamma/beta: (F,).

    The nn.Linear bias is NOT an argument: under training-mode BatchNorm a
    per-feature constant is mathematically a no-op, so it is dropped entirely.
    """
    B, K = x.shape
    Kw, F = w.shape
    assert K == Kw and K == F, "residual branch requires in_features == out_features"
    out_dtype = x.dtype if out_dtype is None else jnp.dtype(out_dtype)

    if tile_n is None:
        # Lane-dense, MXU-friendly tiles (prefer multiples of 256 for v6e/v7x MXU N).
        if F <= 512:
            tile_n = F
        elif F % 512 == 0:
            tile_n = 512
        else:
            tile_n = 256
    assert F % tile_n == 0 and tile_n % 128 == 0 and B % 8 == 0 and K % 128 == 0

    cast_x = (jnp.dtype(w.dtype) != jnp.dtype(x.dtype))

    g2 = gamma.reshape(1, F).astype(jnp.float32)
    be2 = beta.reshape(1, F).astype(jnp.float32)
    mbw = jnp.asarray([main_branch_weight], dtype=jnp.float32)

    grid = (F // tile_n,)
    itx = jnp.dtype(x.dtype).itemsize
    itw = jnp.dtype(w.dtype).itemsize
    ito = jnp.dtype(out_dtype).itemsize

    cost = pl.CostEstimate(
        flops=2 * B * K * F,
        transcendentals=F,                              # rsqrt per feature
        bytes_accessed=(B * K * itx                     # x read exactly once
                        + K * F * itw                   # weights
                        + 2 * F * 4                     # gamma, beta
                        + B * F * ito))                 # output

    # VMEM budget: single-buffered x scratch (+ optional matmul-dtype copy),
    # double-buffered W / gamma / beta (padded to 8 sublanes) / output tiles.
    scratch_bytes = B * K * itx + (B * K * itw if cast_x else 0)
    pipelined = 2 * (K * tile_n * itw + 2 * 8 * tile_n * 4 + B * tile_n * ito)
    need = scratch_bytes + pipelined + (2 << 20)

    compiler_kwargs = dict(dimension_semantics=("arbitrary",))
    if need > (12 << 20):
        try:
            cap = int(0.85 * pltpu.get_tpu_info().vmem_capacity_bytes)
        except Exception:
            cap = 48 << 20                              # conservative (v7x-safe)
        compiler_kwargs["vmem_limit_bytes"] = min(need, cap)

    scratch_shapes = [pltpu.VMEM((B, K), x.dtype)]      # f32 x (residual source)
    if cast_x:
        scratch_shapes.append(pltpu.VMEM((B, K), w.dtype))   # matmul-dtype x copy
    scratch_shapes.append(pltpu.SemaphoreType.DMA((1,)))

    kernel = functools.partial(inr_block_kernel, tile_n=tile_n, cast_x=cast_x)
    return pl.pallas_call(
        kernel,
        out_shape=jax.ShapeDtypeStruct((B, F), out_dtype),
        grid_spec=pltpu.PrefetchScalarGridSpec(
            num_scalar_prefetch=0,
            grid=grid,
            in_specs=[
                pl.BlockSpec(memory_space=pltpu.MemorySpace.SMEM),  # mbw scalar
                pl.BlockSpec(memory_space=pl.ANY),                  # x: raw HBM ref, single-buffered via scratch
                pl.BlockSpec((K, tile_n), lambda j: (0, j)),        # W tile
                pl.BlockSpec((1, tile_n), lambda j: (0, j)),        # gamma
                pl.BlockSpec((1, tile_n), lambda j: (0, j)),        # beta
            ],
            out_specs=pl.BlockSpec((B, tile_n), lambda j: (0, j)),
            scratch_shapes=scratch_shapes,
        ),
        compiler_params=pltpu.CompilerParams(**compiler_kwargs),
        cost_estimate=cost,
    )(mbw, x, w, g2, be2)


def reference(x, w, b, gamma, beta, mbw):
    """Pure-JAX reference matching the PyTorch module (Linear WITH bias)."""
    y = x @ w + b
    mean = jnp.mean(y, axis=0, keepdims=True)
    var = jnp.mean((y - mean) ** 2, axis=0, keepdims=True)
    y = gamma * ((y - mean) / jnp.sqrt(var + BN_EPS)) + beta
    y = jnp.maximum(y, 0.0)
    return x + mbw * y


if __name__ == "__main__":
    B, F = 8, 256                      # batch, in_features == out_features
    main_branch_weight = 0.1

    key = jax.random.PRNGKey(0)
    kx, kw, kb, kg, kbe = jax.random.split(key, 5)

    x = jax.random.normal(kx, (B, F), dtype=jnp.float32)
    # nn.Linear init ~ U(-1/sqrt(in), 1/sqrt(in)); stored transposed (in, out).
    bound = 1.0 / (F ** 0.5)
    w = jax.random.uniform(kw, (F, F), jnp.float32, -bound, bound)
    b = jax.random.uniform(kb, (F,), jnp.float32, -bound, bound)
    gamma = 1.0 + 0.1 * jax.random.normal(kg, (F,), dtype=jnp.float32)
    beta = 0.1 * jax.random.normal(kbe, (F,), dtype=jnp.float32)

    # Parameter-init-time cast: the bf16 weight copy is created ONCE and reused
    # across calls (never cast per call inside the wrapper).
    w_bf16 = jax.block_until_ready(w.astype(jnp.bfloat16))

    # Reference uses f32 weights AND the linear bias; the kernel drops the bias
    # (exact under train-mode BN), so bf16 tolerance covers only MXU-operand quantization.
    ref = reference(x, w, b, gamma, beta, main_branch_weight)

    # Cached bf16 weights, tile_n = F (single grid step).
    out = inr_generator_block(x, w_bf16, gamma, beta, main_branch_weight)
    out = jax.block_until_ready(out)
    assert out.shape == (B, F)
    assert jnp.allclose(out, ref, atol=5e-3, rtol=5e-3), "bf16 path mismatch"

    # Multi-tile path (grid > 1): exercises the hoisted x cast reuse + residual slice.
    out2 = inr_generator_block(x, w_bf16, gamma, beta, main_branch_weight, tile_n=128)
    out2 = jax.block_until_ready(out2)
    assert jnp.allclose(out2, ref, atol=5e-3, rtol=5e-3), "tiled bf16 path mismatch"

    # Single-use f32 weights: streamed directly, no cast scratch allocated.
    out3 = inr_generator_block(x, w, gamma, beta, main_branch_weight)
    out3 = jax.block_until_ready(out3)
    assert jnp.allclose(out3, ref, atol=1e-3, rtol=1e-3), "f32 path mismatch"

    print("KERNEL_OK")
</pallas_src>

<mosaic_0001>
module attributes {stable_mosaic.version = 11 : i64} {
  func.func @inr_block_kernel(%arg0: i32, %arg1: memref<1xf32, #tpu.memory_space<smem>>, %arg2: memref<8x256xf32, #tpu.memory_space<any>>, %arg3: memref<256x256xbf16, #tpu.memory_space<vmem>>, %arg4: memref<1x256xf32, #tpu.memory_space<vmem>>, %arg5: memref<1x256xf32, #tpu.memory_space<vmem>>, %arg6: memref<8x256xf32, #tpu.memory_space<vmem>>, %arg7: memref<8x256xf32, #tpu.memory_space<vmem>>, %arg8: memref<8x256xbf16, #tpu.memory_space<vmem>>, %arg9: memref<1x!tpu.dma_semaphore, #tpu.memory_space<semaphore_mem>>) attributes {dimension_semantics = [#tpu.dimension_semantics<arbitrary>], iteration_bounds = array<i64: 1>, scalar_prefetch = 0 : i64, scratch_operands = 3 : i64, tpu.core_type = #tpu.core_type<tc>, window_params = [{transform_indices = @transform_0, window_bounds = array<i64: 1>}, {}, {transform_indices = @transform_2, window_bounds = array<i64: 256, 256>}, {transform_indices = @transform_3, window_bounds = array<i64: 1, 256>}, {transform_indices = @transform_4, window_bounds = array<i64: 1, 256>}, {transform_indices = @transform_5, window_bounds = array<i64: 8, 256>}]} {
    %c0_i32 = arith.constant 0 : i32
    %0 = arith.cmpi eq, %arg0, %c0_i32 : i32
    %1 = arith.extui %0 : i1 to i32
    %c0_i32_0 = arith.constant 0 : i32
    %2 = arith.cmpi ne, %1, %c0_i32_0 : i32
    scf.if %2 {
      %c0_i32_20 = arith.constant 0 : i32
      %39 = tpu.memref_slice %arg9[%c0_i32_20] : memref<1x!tpu.dma_semaphore, #tpu.memory_space<semaphore_mem>> -> memref<1x!tpu.dma_semaphore, #tpu.memory_space<semaphore_mem>>
      %40 = tpu.memref_squeeze %39 : memref<1x!tpu.dma_semaphore, #tpu.memory_space<semaphore_mem>> -> memref<!tpu.dma_semaphore, #tpu.memory_space<semaphore_mem>>
      tpu.enqueue_dma source(%arg2 : memref<8x256xf32, #tpu.memory_space<any>>) target(%arg7 : memref<8x256xf32, #tpu.memory_space<vmem>>) target_semaphore(%40 : memref<!tpu.dma_semaphore, #tpu.memory_space<semaphore_mem>>)
      %c0_i32_21 = arith.constant 0 : i32
      %41 = tpu.memref_slice %arg9[%c0_i32_21] : memref<1x!tpu.dma_semaphore, #tpu.memory_space<semaphore_mem>> -> memref<1x!tpu.dma_semaphore, #tpu.memory_space<semaphore_mem>>
      %42 = tpu.memref_squeeze %41 : memref<1x!tpu.dma_semaphore, #tpu.memory_space<semaphore_mem>> -> memref<!tpu.dma_semaphore, #tpu.memory_space<semaphore_mem>>
      tpu.wait_dma2 semaphore(%42 : memref<!tpu.dma_semaphore, #tpu.memory_space<semaphore_mem>>) src(%arg2 : memref<8x256xf32, #tpu.memory_space<any>>) dst(%arg7 : memref<8x256xf32, #tpu.memory_space<vmem>>)
      %c0_22 = arith.constant 0 : index
      %c0_23 = arith.constant 0 : index
      %43 = vector.load %arg7[%c0_22, %c0_23] : memref<8x256xf32, #tpu.memory_space<vmem>>, vector<8x256xf32>
      %44 = arith.truncf %43 : vector<8x256xf32> to vector<8x256xbf16>
      %c0_24 = arith.constant 0 : index
      %c0_25 = arith.constant 0 : index
      %45 = vector.load %arg8[%c0_24, %c0_25] : memref<8x256xbf16, #tpu.memory_space<vmem>>, vector<8x256xbf16>
      tpu.vector_store %arg8[%c0_24, %c0_25], %44 {strides = array<i32>} : memref<8x256xbf16, #tpu.memory_space<vmem>>, vector<8x256xbf16>,
    } else {
    }
    %c0 = arith.constant 0 : index
    %c0_1 = arith.constant 0 : index
    %3 = vector.load %arg8[%c0, %c0_1] : memref<8x256xbf16, #tpu.memory_space<vmem>>, vector<8x256xbf16>
    %c0_2 = arith.constant 0 : index
    %c0_3 = arith.constant 0 : index
    %4 = vector.load %arg3[%c0_2, %c0_3] : memref<256x256xbf16, #tpu.memory_space<vmem>>, vector<256x256xbf16>
    %cst = arith.constant dense<0.000000e+00> : vector<8x256xf32>
    %5 = tpu.matmul %3, %4, %cst {dimension_numbers = #tpu.dot_dimension_numbers<[1], [0], [0], [1], [0, 0, 1, 1], [], []>} : vector<8x256xbf16>, vector<256x256xbf16>, vector<8x256xf32> -> vector<8x256xf32>
    %cst_4 = arith.constant dense<0.000000e+00> : vector<256xf32>
    %6 = vector.multi_reduction <add>, %5, %cst_4 [0] : vector<8x256xf32> to vector<256xf32>
    %7 = vector.shape_cast %6 : vector<256xf32> to vector<1x256xf32>
    %8 = arith.mulf %5, %5 : vector<8x256xf32>
    %cst_5 = arith.constant dense<0.000000e+00> : vector<256xf32>
    %9 = vector.multi_reduction <add>, %8, %cst_5 [0] : vector<8x256xf32> to vector<256xf32>
    %10 = vector.shape_cast %9 : vector<256xf32> to vector<1x256xf32>
    %cst_6 = arith.constant 1.250000e-01 : f32
    %11 = vector.broadcast %cst_6 : f32 to vector<1x256xf32>
    %12 = arith.mulf %7, %11 : vector<1x256xf32>
    %cst_7 = arith.constant 1.250000e-01 : f32
    %13 = vector.broadcast %cst_7 : f32 to vector<1x256xf32>
    %14 = arith.mulf %10, %13 : vector<1x256xf32>
    %15 = arith.mulf %12, %12 : vector<1x256xf32>
    %16 = arith.subf %14, %15 : vector<1x256xf32>
    %cst_8 = arith.constant 0.000000e+00 : f32
    %17 = vector.broadcast %cst_8 : f32 to vector<1x256xf32>
    %18 = arith.maximumf %16, %17 : vector<1x256xf32>
    %c0_9 = arith.constant 0 : index
    %c0_10 = arith.constant 0 : index
    %19 = vector.load %arg4[%c0_9, %c0_10] : memref<1x256xf32, #tpu.memory_space<vmem>>, vector<1x256xf32>
    %cst_11 = arith.constant 9.99999974E-6 : f32
    %20 = vector.broadcast %cst_11 : f32 to vector<1x256xf32>
    %21 = arith.addf %18, %20 : vector<1x256xf32>
    %22 = math.rsqrt %21 : vector<1x256xf32>
    %23 = arith.mulf %19, %22 : vector<1x256xf32>
    %c0_12 = arith.constant 0 : index
    %c0_13 = arith.constant 0 : index
    %24 = vector.load %arg5[%c0_12, %c0_13] : memref<1x256xf32, #tpu.memory_space<vmem>>, vector<1x256xf32>
    %25 = arith.mulf %23, %12 : vector<1x256xf32>
    %26 = arith.subf %24, %25 : vector<1x256xf32>
    %27 = vector.broadcast %23 : vector<1x256xf32> to vector<8x256xf32>
    %28 = arith.mulf %27, %5 : vector<8x256xf32>
    %29 = vector.broadcast %26 : vector<1x256xf32> to vector<8x256xf32>
    %30 = arith.addf %28, %29 : vector<8x256xf32>
    %cst_14 = arith.constant 0.000000e+00 : f32
    %31 = vector.broadcast %cst_14 : f32 to vector<8x256xf32>
    %32 = arith.maximumf %30, %31 : vector<8x256xf32>
    %c0_15 = arith.constant 0 : index
    %c0_16 = arith.constant 0 : index
    %33 = vector.load %arg7[%c0_15, %c0_16] : memref<8x256xf32, #tpu.memory_space<vmem>>, vector<8x256xf32>
    %c0_17 = arith.constant 0 : index
    %34 = memref.load %arg1[%c0_17] : memref<1xf32, #tpu.memory_space<smem>>
    %35 = vector.broadcast %34 : f32 to vector<8x256xf32>
    %36 = arith.mulf %35, %32 : vector<8x256xf32>
    %37 = arith.addf %33, %36 : vector<8x256xf32>
    %c0_18 = arith.constant 0 : index
    %c0_19 = arith.constant 0 : index
    %38 = vector.load %arg6[%c0_18, %c0_19] : memref<8x256xf32, #tpu.memory_space<vmem>>, vector<8x256xf32>
    tpu.vector_store %arg6[%c0_18, %c0_19], %37 {strides = array<i32>} : memref<8x256xf32, #tpu.memory_space<vmem>>, vector<8x256xf32>,
    return
  }
  func.func @transform_0(%arg0: i32) -> i32 {
    %c0_i32 = arith.constant 0 : i32
    %c0_i32_0 = arith.constant 0 : i32
    return %c0_i32 : i32
  }
  func.func @transform_2(%arg0: i32) -> (i32, i32) {
    %c0_i32 = arith.constant 0 : i32
    %c0_i32_0 = arith.constant 0 : i32
    return %c0_i32, %arg0 : i32, i32
  }
  func.func @transform_3(%arg0: i32) -> (i32, i32) {
    %c0_i32 = arith.constant 0 : i32
    %c0_i32_0 = arith.constant 0 : i32
    return %c0_i32, %arg0 : i32, i32
  }
  func.func @transform_4(%arg0: i32) -> (i32, i32) {
    %c0_i32 = arith.constant 0 : i32
    %c0_i32_0 = arith.constant 0 : i32
    return %c0_i32, %arg0 : i32, i32
  }
  func.func @transform_5(%arg0: i32) -> (i32, i32) {
    %c0_i32 = arith.constant 0 : i32
    %c0_i32_0 = arith.constant 0 : i32
    return %c0_i32, %arg0 : i32, i32
  }
}

</mosaic_0001>

<llo_original>
// kernel: tpu_custom_call.1
$region0: #{tpu_custom_call.1}
  #allocation0 [shape = 'u32[]', space=smem, size = 0x4, offset = 0x4, fixed_abs, tag = 'smem constant byte address 0x4 - core index']
  #allocation1 [shape = 'u32[144,128]{1,0:T(1,128)}', space=vmem, size = 0x12000, scoped, tag = 'internal scratch']
  #allocation2 [shape = 'f32[8,256]{1,0:T(8,128)}', space=vmem, size = 0x2000, scoped, tag = 'scratch operand']
  #allocation3 [shape = 'bf16[8,256]{1,0:T(8,128)(2,1)}', space=vmem, size = 0x1000, scoped, tag = 'scratch operand']
  #allocation4 [shape = 's32[1]{0}', space=sflag, size = 0x4, scoped, tag = 'scratch operand']
  #allocation5 [shape = 'f32[1]{0:T(128)S(6)}', space=smem, size = 0x200, scoped, tag = 'scoped memory for tpu_custom_call.1']
  #allocation10 [shape = 's32[]', space=sflag, size = 0x4, offset = 0, fixed_abs, tag = 'sflag constant byte address 0x0 - dummy sync flag']
  #allocation11 [shape = 's32[]', space=sflag, size = 0x4, offset = 0, fixed_abs, tag = 'sflag constant byte address 0x0 - dummy sync flag']
  #allocation12 [shape = 'u32[]', space=smem, size = 0x4, offset = 0x44, fixed_abs, tag = 'smem constant byte address 0x44 - assertion arg 0']
  #allocation13 [shape = 'u32[]', space=smem, size = 0x4, offset = 0x48, fixed_abs, tag = 'smem constant byte address 0x48 - assertion arg 1']
  %s0 = inlined_call_operand.<no memory space> [shape: f32[1], index: 0, kind: input, shape index: {}]
  %s1 = inlined_call_operand.hbm [shape: f32[8,256], index: 1, kind: input, shape index: {}]
  %s2 = inlined_call_operand.hbm [shape: bf16[256,256], index: 2, kind: input, shape index: {}]
  %s3 = inlined_call_operand.vmem [shape: f32[1,256], index: 3, kind: input, shape index: {}]
  %s4 = inlined_call_operand.vmem [shape: f32[1,256], index: 4, kind: input, shape index: {}]
  %s5 = inlined_call_operand.hbm [shape: f32[8,256], index: 5, kind: output, shape index: {}]
  %s6 = sld [smem:[#allocation0]]
  $region38: #{tpu_custom_call.1} parent=0
    _
  %s8 = ssub.s32 1, %s6
  %s9 = scalar_select 0, %s8, %s6
  %10 = sst [smem:[#allocation5]] %s0
  $region1: #{tpu_custom_call.1} parent=0
    #allocation6 [shape = 'u8[131072]{0}', space=vmem, size = 0x20000, scoped, tag = 'input window, operand 2, single buffered']
    #allocation7 [shape = 's32[1]{0}', space=sflag, size = 0x4, scoped, tag = 'scoped memory for tpu_custom_call.1']
    #allocation8 [shape = 's32[1]{0}', space=sflag, size = 0x4, scoped, tag = 'scoped memory for tpu_custom_call.1']
    #allocation9 [shape = 'u8[8192]{0}', space=vmem, size = 0x2000, scoped, tag = 'output window, operand 0, single buffered']
    %11 = vsyncpa [#allocation7], 0
    %12 = vsyncpa [#allocation8], 0
    // Predicated region
    $region2: #{tpu_custom_call.1} parent=1 // pred_check
      _
    $region3: #{tpu_custom_call.1} parent=1 // pred_check_branch
      %14 = sbr.rel (0) target = $region5
    $region4: #{tpu_custom_call.1} parent=1 // pred_region
      _
    $region5: #{tpu_custom_call.1} parent=1 // pred_fallthru
      _
    // Predicated region
    $region6: #{tpu_custom_call.1} parent=1 // pred_check
      _
    $region7: #{tpu_custom_call.1} parent=1 // pred_check_branch
      %16 = sbr.rel (0) target = $region9
    $region8: #{tpu_custom_call.1} parent=1 // pred_region
      %s18 = ssub.s32 4096, 4096
      %19 = vsyncadd [#allocation7], %s18
      %s20 = sshll.u32 [#allocation6], 4
      %s21 = int_to_ptr.vmem [resolvable:$true] %s20
      %26 = dma.hbm_to_vmem [thread:$0]  %s2, 4096, %s21, [#allocation7], 128, 128, 8
    $region9: #{tpu_custom_call.1} parent=1 // pred_fallthru
      _
    // Predicated region
    $region10: #{tpu_custom_call.1} parent=1 // pred_check
      _
    $region11: #{tpu_custom_call.1} parent=1 // pred_check_branch
      %28 = sbr.rel (0) target = $region13
    $region12: #{tpu_custom_call.1} parent=1 // pred_region
      _
    $region13: #{tpu_custom_call.1} parent=1 // pred_fallthru
      _
    // Predicated region
    $region14: #{tpu_custom_call.1} parent=1 // pred_check
      _
    $region15: #{tpu_custom_call.1} parent=1 // pred_check_branch
      %30 = sbr.rel (0) target = $region17
    $region16: #{tpu_custom_call.1} parent=1 // pred_region
      _
    $region17: #{tpu_custom_call.1} parent=1 // pred_fallthru
      _
    // Predicated region
    $region18: #{tpu_custom_call.1} parent=1 // pred_check
      _
    $region19: #{tpu_custom_call.1} parent=1 // pred_check_branch
      %32 = sbr.rel (0) target = $region21
    $region20: #{tpu_custom_call.1} parent=1 // pred_region
      %33 = dma.done [#allocation7], 4096
    $region21: #{tpu_custom_call.1} parent=1 // pred_fallthru
      _
    %p34 = scmp.eq.s32.totalorder 0, 0
    // Predicated region
    $region22: #{tpu_custom_call.1} parent=1 // pred_check
      %p35 = pneg %p34
    $region23: #{tpu_custom_call.1} parent=1 // pred_check_branch
      %37 = sbr.rel (%p35) target = $region25
    $region24: #{tpu_custom_call.1} parent=1 // pred_region
      // Predicated region
      $region26: #{tpu_custom_call.1} parent=24 // pred_check
        _
      $region27: #{tpu_custom_call.1} parent=24 // pred_check_branch
        %39 = sbr.rel target = $region29
      $region28: #{tpu_custom_call.1} parent=24 // pred_region
        %40 = sst [smem:[#allocation12]] [#allocation11]
        %41 = sst [smem:[#allocation13]] [#allocation10]
      $region29: #{tpu_custom_call.1} parent=24 // pred_fallthru
        _
      %43 = shalt.err (0)
      %s45 = sshll.u32 [#allocation2], 4
      %s46 = int_to_ptr.vmem [resolvable:$true] %s45
      %48 = dma.hbm_to_vmem [thread:$0]  %s1, 256, %s46, [#allocation4]
      %s49 = smul.u32 8, 1
      %s50 = smul.u32 %s49, 2
      %s51 = sshll.u32 %s50, 4
      %52 = dma.done [#allocation4], %s51
      %v53 = vld [vmem:[#allocation2] sm:$0xff]
      %v54 = vld [vmem:[#allocation2 + $0x8] sm:$0xff]
      %v55 = vpack.c.bf16 %v53, %v53
      %v56 = vpack.c.bf16 %v54, %v54
      %v59 = vunpack.c.l.b16 %v55
      %v60 = vunpack.c.l.b16 %v56
      %v61 = vpack.c.b16 %v60, %v59
      %63 = vst [vmem:[#allocation3] sm:$0xff] %v61
    $region25: #{tpu_custom_call.1} parent=1 // pred_fallthru
      _
    %v64 = vld [vmem:[#allocation3] sm:$0xff]
    %v65 = vld [vmem:[#allocation6] sm:$0xff]
    %v66 = vld [vmem:[#allocation6 + $0x8] sm:$0xff]
    %v67 = vld [vmem:[#allocation6 + $0x10] sm:$0xff]
    %v68 = vld [vmem:[#allocation6 + $0x18] sm:$0xff]
    %v69 = vld [vmem:[#allocation6 + $0x20] sm:$0xff]
    %v70 = vld [vmem:[#allocation6 + $0x28] sm:$0xff]
    %v71 = vld [vmem:[#allocation6 + $0x30] sm:$0xff]
    %v72 = vld [vmem:[#allocation6 + $0x38] sm:$0xff]
    %v73 = vld [vmem:[#allocation6 + $0x40] sm:$0xff]
    %v74 = vld [vmem:[#allocation6 + $0x48] sm:$0xff]
    %v75 = vld [vmem:[#allocation6 + $0x50] sm:$0xff]
    %v76 = vld [vmem:[#allocation6 + $0x58] sm:$0xff]
    %v77 = vld [vmem:[#allocation6 + $0x60] sm:$0xff]
    %v78 = vld [vmem:[#allocation6 + $0x68] sm:$0xff]
    %v79 = vld [vmem:[#allocation6 + $0x70] sm:$0xff]
    %v80 = vld [vmem:[#allocation6 + $0x78] sm:$0xff]
    %v81 = vld [vmem:[#allocation6 + $0x80] sm:$0xff]
    %v82 = vld [vmem:[#allocation6 + $0x88] sm:$0xff]
    %v83 = vld [vmem:[#allocation6 + $0x90] sm:$0xff]
    %v84 = vld [vmem:[#allocation6 + $0x98] sm:$0xff]
    %v85 = vld [vmem:[#allocation6 + $0xa0] sm:$0xff]
    %v86 = vld [vmem:[#allocation6 + $0xa8] sm:$0xff]
    %v87 = vld [vmem:[#allocation6 + $0xb0] sm:$0xff]
    %v88 = vld [vmem:[#allocation6 + $0xb8] sm:$0xff]
    %v89 = vld [vmem:[#allocation6 + $0xc0] sm:$0xff]
    %v90 = vld [vmem:[#allocation6 + $0xc8] sm:$0xff]
    %v91 = vld [vmem:[#allocation6 + $0xd0] sm:$0xff]
    %v92 = vld [vmem:[#allocation6 + $0xd8] sm:$0xff]
    %v93 = vld [vmem:[#allocation6 + $0xe0] sm:$0xff]
    %v94 = vld [vmem:[#allocation6 + $0xe8] sm:$0xff]
    %v95 = vld [vmem:[#allocation6 + $0xf0] sm:$0xff]
    %v96 = vld [vmem:[#allocation6 + $0xf8] sm:$0xff]
    %v98 = vunpack.c.l.b16 %v64
    %v99 = vunpack.c.h.b16 %v64
    %v100 = vpack.c.b16 %v98, %v98
    %v101 = vpack.c.b16 %v99, %v99
    %v136 = vunpack.c.l.b16 %v65
    %v137 = vunpack.c.h.b16 %v65
    %v138 = vunpack.c.l.b16 %v66
    %v139 = vunpack.c.h.b16 %v66
    %v140 = vunpack.c.l.b16 %v67
    %v141 = vunpack.c.h.b16 %v67
    %v142 = vunpack.c.l.b16 %v68
    %v143 = vunpack.c.h.b16 %v68
    %v144 = vunpack.c.l.b16 %v69
    %v145 = vunpack.c.h.b16 %v69
    %v146 = vunpack.c.l.b16 %v70
    %v147 = vunpack.c.h.b16 %v70
    %v148 = vunpack.c.l.b16 %v71
    %v149 = vunpack.c.h.b16 %v71
    %v150 = vunpack.c.l.b16 %v72
    %v151 = vunpack.c.h.b16 %v72
    %v152 = vunpack.c.l.b16 %v73
    %v153 = vunpack.c.h.b16 %v73
    %v154 = vunpack.c.l.b16 %v74
    %v155 = vunpack.c.h.b16 %v74
    %v156 = vunpack.c.l.b16 %v75
    %v157 = vunpack.c.h.b16 %v75
    %v158 = vunpack.c.l.b16 %v76
    %v159 = vunpack.c.h.b16 %v76
    %v160 = vunpack.c.l.b16 %v77
    %v161 = vunpack.c.h.b16 %v77
    %v162 = vunpack.c.l.b16 %v78
    %v163 = vunpack.c.h.b16 %v78
    %v164 = vunpack.c.l.b16 %v79
    %v165 = vunpack.c.h.b16 %v79
    %v166 = vunpack.c.l.b16 %v80
    %v167 = vunpack.c.h.b16 %v80
    %v168 = vunpack.c.l.b16 %v81
    %v169 = vunpack.c.h.b16 %v81
    %v170 = vunpack.c.l.b16 %v82
    %v171 = vunpack.c.h.b16 %v82
    %v172 = vunpack.c.l.b16 %v83
    %v173 = vunpack.c.h.b16 %v83
    %v174 = vunpack.c.l.b16 %v84
    %v175 = vunpack.c.h.b16 %v84
    %v176 = vunpack.c.l.b16 %v85
    %v177 = vunpack.c.h.b16 %v85
    %v178 = vunpack.c.l.b16 %v86
    %v179 = vunpack.c.h.b16 %v86
    %v180 = vunpack.c.l.b16 %v87
    %v181 = vunpack.c.h.b16 %v87
    %v182 = vunpack.c.l.b16 %v88
    %v183 = vunpack.c.h.b16 %v88
    %v184 = vunpack.c.l.b16 %v89
    %v185 = vunpack.c.h.b16 %v89
    %v186 = vunpack.c.l.b16 %v90
    %v187 = vunpack.c.h.b16 %v90
    %v188 = vunpack.c.l.b16 %v91
    %v189 = vunpack.c.h.b16 %v91
    %v190 = vunpack.c.l.b16 %v92
    %v191 = vunpack.c.h.b16 %v92
    %v192 = vunpack.c.l.b16 %v93
    %v193 = vunpack.c.h.b16 %v93
    %v194 = vunpack.c.l.b16 %v94
    %v195 = vunpack.c.h.b16 %v94
    %v196 = vunpack.c.l.b16 %v95
    %v197 = vunpack.c.h.b16 %v95
    %v198 = vunpack.c.l.b16 %v96
    %v199 = vunpack.c.h.b16 %v96
    %v200 = vpack.c.b16 %v138, %v136
    %v201 = vpack.c.b16 %v139, %v137
    %v202 = vpack.c.b16 %v142, %v140
    %v203 = vpack.c.b16 %v143, %v141
    %v204 = vpack.c.b16 %v146, %v144
    %v205 = vpack.c.b16 %v147, %v145
    %v206 = vpack.c.b16 %v150, %v148
    %v207 = vpack.c.b16 %v151, %v149
    %v208 = vpack.c.b16 %v154, %v152
    %v209 = vpack.c.b16 %v155, %v153
    %v210 = vpack.c.b16 %v158, %v156
    %v211 = vpack.c.b16 %v159, %v157
    %v212 = vpack.c.b16 %v162, %v160
    %v213 = vpack.c.b16 %v163, %v161
    %v214 = vpack.c.b16 %v166, %v164
    %v215 = vpack.c.b16 %v167, %v165
    %v216 = vpack.c.b16 %v170, %v168
    %v217 = vpack.c.b16 %v171, %v169
    %v218 = vpack.c.b16 %v174, %v172
    %v219 = vpack.c.b16 %v175, %v173
    %v220 = vpack.c.b16 %v178, %v176
    %v221 = vpack.c.b16 %v179, %v177
    %v222 = vpack.c.b16 %v182, %v180
    %v223 = vpack.c.b16 %v183, %v181
    %v224 = vpack.c.b16 %v186, %v184
    %v225 = vpack.c.b16 %v187, %v185
    %v226 = vpack.c.b16 %v190, %v188
    %v227 = vpack.c.b16 %v191, %v189
    %v228 = vpack.c.b16 %v194, %v192
    %v229 = vpack.c.b16 %v195, %v193
    %v230 = vpack.c.b16 %v198, %v196
    %v231 = vpack.c.b16 %v199, %v197
    %264 = vmatprep.subr.bf16.mxu0 %v201
    %265 = vmatpush1.bf16.msra.mxu0 %v200
    %266 = vmatprep.subr.bf16.mxu0 %v203
    %267 = vmatpush1.bf16.msra.mxu0 %v202
    %268 = vmatprep.subr.bf16.mxu0 %v205
    %269 = vmatpush1.bf16.msra.mxu0 %v204
    %270 = vmatprep.subr.bf16.mxu0 %v207
    %271 = vmatpush1.bf16.msra.mxu0 %v206
    %272 = vmatprep.subr.bf16.mxu0 %v209
    %273 = vmatpush1.bf16.msra.mxu0 %v208
    %274 = vmatprep.subr.bf16.mxu0 %v211
    %275 = vmatpush1.bf16.msra.mxu0 %v210
    %276 = vmatprep.subr.bf16.mxu0 %v213
    %277 = vmatpush1.bf16.msra.mxu0 %v212
    %278 = vmatprep.subr.bf16.mxu0 %v215
    %279 = vmatpush1.bf16.msra.mxu0 %v214
    %280 = vmatprep.subr.bf16.mxu0 %v217
    %281 = vmatpush1.bf16.msra.mxu0 %v216
    %282 = vmatprep.subr.bf16.mxu0 %v219
    %283 = vmatpush1.bf16.msra.mxu0 %v218
    %284 = vmatprep.subr.bf16.mxu0 %v221
    %285 = vmatpush1.bf16.msra.mxu0 %v220
    %286 = vmatprep.subr.bf16.mxu0 %v223
    %287 = vmatpush1.bf16.msra.mxu0 %v222
    %288 = vmatprep.subr.bf16.mxu0 %v225
    %289 = vmatpush1.bf16.msra.mxu0 %v224
    %290 = vmatprep.subr.bf16.mxu0 %v227
    %291 = vmatpush1.bf16.msra.mxu0 %v226
    %292 = vmatprep.subr.bf16.mxu0 %v229
    %293 = vmatpush1.bf16.msra.mxu0 %v228
    %294 = vmatprep.subr.bf16.mxu0 %v231
    %295 = vmatpush1.bf16.msra.mxu0 %v230
    %296 = vmatprep.mubr.bf16.mxu0 %v101
    %297 = vmatmul.mubr.bf16.gmra.mrb[0].mxu0 %v100
    %v298 = vpop.f32.mrb[0].mxu0
    %v299 = vadd.f32 0.0, %v298
    %v300 = vpop.f32.mrb[0].mxu0
    %v301 = vadd.f32 0.0, %v300
    %v302 = vpop.f32.mrb[0].mxu0
    %v303 = vpop.f32.mrb[0].mxu0
    %304 = vdwg.mxu0
    %v305 = vrot.slane %v299, 4
    %v306 = vadd.f32 %v299, %v305
    %v307 = vrot.slane %v306, 2
    %v308 = vadd.f32 %v306, %v307
    %v309 = vrot.slane %v308, 1
    %v310 = vadd.f32 %v308, %v309
    %v311 = vrot.slane %v301, 4
    %v312 = vadd.f32 %v301, %v311
    %v313 = vrot.slane %v312, 2
    %v314 = vadd.f32 %v312, %v313
    %v315 = vrot.slane %v314, 1
    %v316 = vadd.f32 %v314, %v315
    %v317 = vmul.f32 %v299, %v299
    %v318 = vmul.f32 %v301, %v301
    %v319 = vrot.slane %v317, 4
    %v320 = vadd.f32 %v317, %v319
    %v321 = vrot.slane %v320, 2
    %v322 = vadd.f32 %v320, %v321
    %v323 = vrot.slane %v322, 1
    %v324 = vadd.f32 %v322, %v323
    %v325 = vrot.slane %v318, 4
    %v326 = vadd.f32 %v318, %v325
    %v327 = vrot.slane %v326, 2
    %v328 = vadd.f32 %v326, %v327
    %v329 = vrot.slane %v328, 1
    %v330 = vadd.f32 %v328, %v329
    %v331 = vmul.f32 %v310, 0.125
    %v332 = vmul.f32 %v316, 0.125
    %v333 = vmul.f32 %v324, 0.125
    %v334 = vmul.f32 %v330, 0.125
    %v335 = vmul.f32 %v331, %v331
    %v336 = vmul.f32 %v332, %v332
    %v337 = vsub.f32 %v333, %v335
    %v338 = vsub.f32 %v334, %v336
    %v339 = vmax.f32 %v337, 0.0
    %v340 = vmax.f32 %v338, 0.0
    %v341 = vld [vmem:[%s3] sm:$0x3]
    %v342 = vadd.f32 %v339, 1e-05
    %v343 = vadd.f32 %v340, 1e-05
    %v344 = vrsqrt.pop %v342
    %v345 = vrsqrt.pop %v343
    %v348 = vcombine.low %v344, %v345
    %v350 = vunpack.c.l.s4 1966171168
    %v351 = vunpack.c.0.s8 %v350
    %v352 = vlaneseq
    %v353 = vshrl.u32 %v352, 7
    %v354 = vsub.s32 %v351, %v353
    %v355 = vrot.slane %v348, %v354
    %v357 = vunpack.c.l.s4 1966171168
    %v358 = vunpack.c.0.s8 %v357
    %v359 = vlaneseq
    %v360 = vshrl.u32 %v359, 7
    %v361 = vsub.s32 %v358, %v360
    %v362 = vrot.slane %v355, %v361
    %v364 = vmul.f32 %v341, %v362
    %v365 = vld [vmem:[%s4] sm:$0x3]
    %v368 = vcombine.low %v331, %v332
    %v370 = vunpack.c.l.s4 1966171168
    %v371 = vunpack.c.0.s8 %v370
    %v372 = vlaneseq
    %v373 = vshrl.u32 %v372, 7
    %v374 = vsub.s32 %v371, %v373
    %v375 = vrot.slane %v368, %v374
    %v377 = vunpack.c.l.s4 1966171168
    %v378 = vunpack.c.0.s8 %v377
    %v379 = vlaneseq
    %v380 = vshrl.u32 %v379, 7
    %v381 = vsub.s32 %v378, %v380
    %v382 = vrot.slane %v375, %v381
    %v384 = vmul.f32 %v364, %v382
    %v385 = vsub.f32 %v365, %v384
    %v387 = vlaneseq
    %v388 = vshrl.u32 %v387, 7
    %v389 = vsub.s32 0, %v388
    %v390 = vrot.slane %v364, %v389
    %v391 = vlaneseq
    %v392 = vshrl.u32 %v391, 7
    %v393 = vsub.s32 1, %v392
    %v394 = vrot.slane %v364, %v393
    %v397 = vmul.f32 %v390, %v299
    %v398 = vmul.f32 %v394, %v301
    %v400 = vlaneseq
    %v401 = vshrl.u32 %v400, 7
    %v402 = vsub.s32 0, %v401
    %v403 = vrot.slane %v385, %v402
    %v404 = vlaneseq
    %v405 = vshrl.u32 %v404, 7
    %v406 = vsub.s32 1, %v405
    %v407 = vrot.slane %v385, %v406
    %v410 = vadd.f32 %v397, %v403
    %v411 = vadd.f32 %v398, %v407
    %v412 = vmax.f32 %v410, 0.0
    %v413 = vmax.f32 %v411, 0.0
    %v414 = vld [vmem:[#allocation2] sm:$0xff]
    %v415 = vld [vmem:[#allocation2 + $0x8] sm:$0xff]
    %s416 = sld [smem:[#allocation5]]
    %v417 = vstv %s416
    %v418 = vmul.f32 %v417, %v412
    %v419 = vmul.f32 %v417, %v413
    %v420 = vadd.f32 %v414, %v418
    %v421 = vadd.f32 %v415, %v419
    %422 = vst [vmem:[#allocation9] sm:$0xff] %v420
    %423 = vst [vmem:[#allocation9 + $0x8] sm:$0xff] %v421
    // Predicated region
    $region30: #{tpu_custom_call.1} parent=1 // pred_check
      _
    $region31: #{tpu_custom_call.1} parent=1 // pred_check_branch
      %425 = sbr.rel (0) target = $region33
    $region32: #{tpu_custom_call.1} parent=1 // pred_region
      %s427 = ssub.s32 256, 256
      %428 = vsyncadd [#allocation8], %s427
      %s430 = sshll.u32 [#allocation9], 4
      %s431 = int_to_ptr.vmem [resolvable:$true] %s430
      %433 = dma.vmem_to_hbm [thread:$0]  %s431, 256, %s5, [#allocation8]
    $region33: #{tpu_custom_call.1} parent=1 // pred_fallthru
      _
    // Predicated region
    $region34: #{tpu_custom_call.1} parent=1 // pred_check
      _
    $region35: #{tpu_custom_call.1} parent=1 // pred_check_branch
      %435 = sbr.rel (0) target = $region37
    $region36: #{tpu_custom_call.1} parent=1 // pred_region
      %436 = dma.done [#allocation8], 256
    $region37: #{tpu_custom_call.1} parent=1 // pred_fallthru
      _
    %437 = vsyncpa [#allocation7], 1
    %438 = vsyncpa [#allocation8], 1
  %439 = vsyncmov [#allocation4]
  %s440 = vpop.sfrf %439
  %p441 = scmp.eq.s32.totalorder %s440, 0
  %p442 = pneg %p441
  %444 = shalt.err (%p442)

</llo_original>
